<compile_context>
chip_gen: v6e
topology: v6e:2x2x1
jax: 0.10.0
libtpu: 0.0.40
codegen_flags: <defaults>
</compile_context>

<pallas_src>
import functools

import jax
import jax.numpy as jnp
from jax.experimental import pallas as pl
from jax.experimental.pallas import tpu as pltpu

_LANES = 128


def _round_up(x, m):
    return ((x + m - 1) // m) * m


def _tile_config():
    """Return (default_tile_rows, vmem_limit_bytes) tuned per TPU generation."""
    try:
        kind = jax.devices()[0].device_kind.lower()
    except Exception:  # pragma: no cover - defensive
        kind = ""
    if ("v6" in kind) or ("7x" in kind) or ("v5p" in kind):
        # v6e / v7x: 2048x128 f32 tiles (~9 MiB/step, ~18 MiB double-buffered);
        # raise the scoped-VMEM limit (<= 64 MiB physical on v7x) to fit them.
        return 2048, 40 << 20
    if "v5" in kind:
        # v5e: 1024-row tiles (~9 MiB double-buffered) fit the 16 MiB default.
        return 1024, None
    return 512, None  # unknown / older chips: stay well inside default limits


# ---------------------------------------------------------------------------
# Kernels
# ---------------------------------------------------------------------------
def _iou_loss_tile_math(pred_ref, target_ref, weight_ref, eps):
    """Per-tile weighted -log(IoU).  pred/target: (4, T, 128); weight: (T, 128)."""
    f32 = jnp.float32
    x1p = pred_ref[0].astype(f32)
    y1p = pred_ref[1].astype(f32)
    x2p = pred_ref[2].astype(f32)
    y2p = pred_ref[3].astype(f32)
    x1t = target_ref[0].astype(f32)
    y1t = target_ref[1].astype(f32)
    x2t = target_ref[2].astype(f32)
    y2t = target_ref[3].astype(f32)
    w = weight_ref[...].astype(f32)

    # aligned bbox_overlaps (mode='iou', is_aligned=True), +1 pixel convention
    lt_x = jnp.maximum(x1p, x1t)
    lt_y = jnp.maximum(y1p, y1t)
    rb_x = jnp.minimum(x2p, x2t)
    rb_y = jnp.minimum(y2p, y2t)

    wh_x = jnp.maximum(rb_x - lt_x + 1.0, 0.0)
    wh_y = jnp.maximum(rb_y - lt_y + 1.0, 0.0)
    overlap = wh_x * wh_y

    area1 = (x2p - x1p + 1.0) * (y2p - y1p + 1.0)
    area2 = (x2t - x1t + 1.0) * (y2t - y1t + 1.0)

    # NOTE: faithful to the reference — the union is intentionally NOT clamped.
    ious = jnp.maximum(overlap / (area1 + area2 - overlap), eps)  # .clamp(min=eps)
    return -jnp.log(ious) * w                                     # (T, 128) f32


def _iou_loss_sum_kernel(pred_ref, target_ref, weight_ref, psum_ref, *, eps):
    loss = _iou_loss_tile_math(pred_ref, target_ref, weight_ref, eps)
    # Per-lane partial sums; the tiny (grid, 128) final reduce happens in JAX.
    psum_ref[0] = jnp.sum(loss, axis=0, keepdims=True)


def _iou_loss_elem_kernel(pred_ref, target_ref, weight_ref, loss_ref, *, eps):
    loss = _iou_loss_tile_math(pred_ref, target_ref, weight_ref, eps)
    loss_ref[...] = loss.astype(loss_ref.dtype)


# ---------------------------------------------------------------------------
# Wrappers
# ---------------------------------------------------------------------------
def _prepare_inputs(pred, target, weight):
    """Pad (minimally) + relayout to coordinate-major dense slabs."""
    pred = jnp.asarray(pred)
    target = jnp.asarray(target)
    n = pred.shape[0]

    in_dtype = jnp.bfloat16 if pred.dtype == jnp.bfloat16 else jnp.float32
    def_tile_rows, vmem_limit = _tile_config()

    rows = max(1, pl.cdiv(n, _LANES))
    n_tiles = max(1, pl.cdiv(rows, def_tile_rows))
    if n_tiles == 1 and rows >= 16:
        n_tiles = 2  # ensure >= 2 grid steps so both v7x TensorCores are used
    tile_rows = _round_up(pl.cdiv(rows, n_tiles), 8)  # sublane-aligned, minimal pad
    rows_pad = tile_rows * n_tiles
    n_pad = rows_pad * _LANES

    pred_p = jnp.pad(pred.astype(in_dtype), ((0, n_pad - n), (0, 0)))
    tgt_p = jnp.pad(target.astype(in_dtype), ((0, n_pad - n), (0, 0)))
    # coordinate-major (4, rows_pad, 128): box j -> (j // 128, j % 128)
    pred_cm = pred_p.T.reshape(4, rows_pad, _LANES)
    tgt_cm = tgt_p.T.reshape(4, rows_pad, _LANES)

    w = jnp.asarray(weight).astype(in_dtype)                    # bf16 path: bf16 weight
    w_p = jnp.pad(w, (0, n_pad - n)).reshape(rows_pad, _LANES)  # padding -> weight 0

    return pred_cm, tgt_cm, w_p, rows_pad, tile_rows, vmem_limit, in_dtype


def _make_in_specs(tile_rows):
    return [
        pl.BlockSpec((4, tile_rows, _LANES), lambda i: (0, i, 0)),
        pl.BlockSpec((4, tile_rows, _LANES), lambda i: (0, i, 0)),
        pl.BlockSpec((tile_rows, _LANES), lambda i: (i, 0)),
    ]


def _compiler_params(vmem_limit, n_inputs):
    return pltpu.CompilerParams(
        dimension_semantics=("parallel",),
        vmem_limit_bytes=vmem_limit,
        # Let XLA fuse the pad/cast/transpose producers of pred_cm / tgt_cm / w
        # into the kernel's input pipeline instead of materializing them in HBM.
        allow_input_fusion=[True] * n_inputs,
    )


def _iou_loss_sum(pred, target, weight, eps):
    """Returns scalar sum_i weight_i * (-log IoU_i)."""
    pred_cm, tgt_cm, w_p, rows_pad, tile_rows, vmem_limit, _ = _prepare_inputs(
        pred, target, weight)
    grid = rows_pad // tile_rows

    partial = pl.pallas_call(
        functools.partial(_iou_loss_sum_kernel, eps=eps),
        out_shape=jax.ShapeDtypeStruct((grid, 1, _LANES), jnp.float32),
        grid=(grid,),
        in_specs=_make_in_specs(tile_rows),
        out_specs=pl.BlockSpec((1, 1, _LANES), lambda i: (i, 0, 0)),
        compiler_params=_compiler_params(vmem_limit, 3),
    )(pred_cm, tgt_cm, w_p)
    return jnp.sum(partial)


def _iou_loss_elementwise(pred, target, weight, eps):
    """Returns per-box weighted loss of shape (N,) in the input float dtype."""
    n = jnp.asarray(pred).shape[0]
    pred_cm, tgt_cm, w_p, rows_pad, tile_rows, vmem_limit, in_dtype = _prepare_inputs(
        pred, target, weight)
    grid = rows_pad // tile_rows

    loss2d = pl.pallas_call(
        functools.partial(_iou_loss_elem_kernel, eps=eps),
        out_shape=jax.ShapeDtypeStruct((rows_pad, _LANES), in_dtype),
        grid=(grid,),
        in_specs=_make_in_specs(tile_rows),
        out_specs=pl.BlockSpec((tile_rows, _LANES), lambda i: (i, 0)),
        compiler_params=_compiler_params(vmem_limit, 3),
    )(pred_cm, tgt_cm, w_p)
    return loss2d.reshape(-1)[:n]


class IoULoss:
    """JAX/Pallas re-implementation of the PyTorch IoULoss module forward."""

    def __init__(self, eps=1e-6, reduction="mean", loss_weight=1.0):
        self.eps = float(eps)
        self.reduction = reduction
        self.loss_weight = float(loss_weight)

    def __call__(self, pred, target, weight=None, avg_factor=None,
                 reduction_override=None):
        assert reduction_override in (None, "none", "mean", "sum")
        reduction = reduction_override if reduction_override else self.reduction

        pred = jnp.asarray(pred)
        target = jnp.asarray(target)
        n = pred.shape[0]

        if weight is None:
            w = jnp.ones((n,), jnp.float32)
        else:
            w = jnp.asarray(weight, jnp.float32)
            if w.ndim > 1:
                # (N, 4) weights (newer-mmdet convention): reduce per box.
                w = w.mean(axis=-1)

        # The PyTorch `if weight is not None and not torch.any(weight > 0)` early
        # exit is intentionally omitted: it forces a device->host sync (and breaks
        # under jit), and when every weight is zero the weighted loss computed
        # below is exactly 0 == (pred * weight).sum(), so forward values agree.

        if reduction == "none":
            loss = _iou_loss_elementwise(pred, target, w, self.eps)
            return self.loss_weight * loss

        loss_sum = _iou_loss_sum(pred, target, w, self.eps)

        # weight_reduce_loss semantics
        if avg_factor is None:
            loss = loss_sum / n if reduction == "mean" else loss_sum
        else:
            if reduction == "mean":
                loss = loss_sum / avg_factor
            else:
                raise ValueError('avg_factor can not be used with reduction="sum"')
        return self.loss_weight * loss


# ---------------------------------------------------------------------------
# Pure-JAX reference + self-test
# ---------------------------------------------------------------------------
def _reference_iou_loss(pred, target, eps):
    lt = jnp.maximum(pred[:, :2], target[:, :2])
    rb = jnp.minimum(pred[:, 2:], target[:, 2:])
    wh = jnp.maximum(rb - lt + 1.0, 0.0)
    overlap = wh[:, 0] * wh[:, 1]
    area1 = (pred[:, 2] - pred[:, 0] + 1.0) * (pred[:, 3] - pred[:, 1] + 1.0)
    area2 = (target[:, 2] - target[:, 0] + 1.0) * (target[:, 3] - target[:, 1] + 1.0)
    ious = jnp.maximum(overlap / (area1 + area2 - overlap), eps)
    return -jnp.log(ious)


if __name__ == "__main__":
    key = jax.random.PRNGKey(0)
    k1, k2, k3, k4, k5 = jax.random.split(key, 5)
    n = 8

    # build valid boxes: (x1, y1, x2, y2) with x2 > x1, y2 > y1
    xy1_p = jax.random.uniform(k1, (n, 2), jnp.float32, 0.0, 20.0)
    wh_p = jax.random.uniform(k2, (n, 2), jnp.float32, 2.0, 15.0)
    pred = jnp.concatenate([xy1_p, xy1_p + wh_p], axis=1)          # (n, 4)

    xy1_t = xy1_p + jax.random.uniform(k3, (n, 2), jnp.float32, -3.0, 3.0)
    wh_t = jax.random.uniform(k4, (n, 2), jnp.float32, 2.0, 15.0)
    target = jnp.concatenate([xy1_t, xy1_t + wh_t], axis=1)        # (n, 4)

    weight = jax.random.uniform(k5, (n,), jnp.float32, 0.5, 1.5)

    module = IoULoss(eps=1e-6, reduction="mean", loss_weight=1.0)

    loss_mean = module(pred, target)                               # weight=None, mean
    loss_wsum = module(pred, target, weight=weight,
                       reduction_override="sum")                   # weighted sum
    loss_none = module(pred, target, weight=weight,
                       reduction_override="none")                  # per-box
    loss_avgf = module(pred, target, weight=weight, avg_factor=3.0)  # mean w/ avg_factor

    jax.block_until_ready((loss_mean, loss_wsum, loss_none, loss_avgf))

    # quick correctness check vs pure-JAX reference
    ref = _reference_iou_loss(pred, target, 1e-6)
    assert jnp.allclose(loss_mean, ref.mean(), rtol=1e-5, atol=1e-5)
    assert jnp.allclose(loss_wsum, (ref * weight).sum(), rtol=1e-5, atol=1e-5)
    assert jnp.allclose(loss_none, ref * weight, rtol=1e-5, atol=1e-5)
    assert jnp.allclose(loss_avgf, (ref * weight).sum() / 3.0, rtol=1e-5, atol=1e-5)

    print("KERNEL_OK")
</pallas_src>

<mosaic_0001>
module attributes {stable_mosaic.version = 11 : i64} {
  func.func @_iou_loss_sum_kernel(%arg0: i32, %arg1: memref<4x8x128xf32, #tpu.memory_space<vmem>>, %arg2: memref<4x8x128xf32, #tpu.memory_space<vmem>>, %arg3: memref<8x128xf32, #tpu.memory_space<vmem>>, %arg4: memref<1x1x128xf32, #tpu.memory_space<vmem>>) attributes {dimension_semantics = [#tpu.dimension_semantics<parallel>], iteration_bounds = array<i64: 1>, scalar_prefetch = 0 : i64, scratch_operands = 0 : i64, tpu.core_type = #tpu.core_type<tc>, window_params = [{transform_indices = @transform_0, window_bounds = array<i64: 4, 8, 128>}, {transform_indices = @transform_1, window_bounds = array<i64: 4, 8, 128>}, {transform_indices = @transform_2, window_bounds = array<i64: 8, 128>}, {transform_indices = @transform_3, window_bounds = array<i64: 1, 1, 128>}]} {
    %c0 = arith.constant 0 : index
    %c0_0 = arith.constant 0 : index
    %c0_1 = arith.constant 0 : index
    %0 = vector.load %arg1[%c0, %c0_0, %c0_1] : memref<4x8x128xf32, #tpu.memory_space<vmem>>, vector<1x8x128xf32>
    %1 = vector.shape_cast %0 : vector<1x8x128xf32> to vector<8x128xf32>
    %c1 = arith.constant 1 : index
    %c0_2 = arith.constant 0 : index
    %c0_3 = arith.constant 0 : index
    %2 = vector.load %arg1[%c1, %c0_2, %c0_3] : memref<4x8x128xf32, #tpu.memory_space<vmem>>, vector<1x8x128xf32>
    %3 = vector.shape_cast %2 : vector<1x8x128xf32> to vector<8x128xf32>
    %c2 = arith.constant 2 : index
    %c0_4 = arith.constant 0 : index
    %c0_5 = arith.constant 0 : index
    %4 = vector.load %arg1[%c2, %c0_4, %c0_5] : memref<4x8x128xf32, #tpu.memory_space<vmem>>, vector<1x8x128xf32>
    %5 = vector.shape_cast %4 : vector<1x8x128xf32> to vector<8x128xf32>
    %c3 = arith.constant 3 : index
    %c0_6 = arith.constant 0 : index
    %c0_7 = arith.constant 0 : index
    %6 = vector.load %arg1[%c3, %c0_6, %c0_7] : memref<4x8x128xf32, #tpu.memory_space<vmem>>, vector<1x8x128xf32>
    %7 = vector.shape_cast %6 : vector<1x8x128xf32> to vector<8x128xf32>
    %c0_8 = arith.constant 0 : index
    %c0_9 = arith.constant 0 : index
    %c0_10 = arith.constant 0 : index
    %8 = vector.load %arg2[%c0_8, %c0_9, %c0_10] : memref<4x8x128xf32, #tpu.memory_space<vmem>>, vector<1x8x128xf32>
    %9 = vector.shape_cast %8 : vector<1x8x128xf32> to vector<8x128xf32>
    %c1_11 = arith.constant 1 : index
    %c0_12 = arith.constant 0 : index
    %c0_13 = arith.constant 0 : index
    %10 = vector.load %arg2[%c1_11, %c0_12, %c0_13] : memref<4x8x128xf32, #tpu.memory_space<vmem>>, vector<1x8x128xf32>
    %11 = vector.shape_cast %10 : vector<1x8x128xf32> to vector<8x128xf32>
    %c2_14 = arith.constant 2 : index
    %c0_15 = arith.constant 0 : index
    %c0_16 = arith.constant 0 : index
    %12 = vector.load %arg2[%c2_14, %c0_15, %c0_16] : memref<4x8x128xf32, #tpu.memory_space<vmem>>, vector<1x8x128xf32>
    %13 = vector.shape_cast %12 : vector<1x8x128xf32> to vector<8x128xf32>
    %c3_17 = arith.constant 3 : index
    %c0_18 = arith.constant 0 : index
    %c0_19 = arith.constant 0 : index
    %14 = vector.load %arg2[%c3_17, %c0_18, %c0_19] : memref<4x8x128xf32, #tpu.memory_space<vmem>>, vector<1x8x128xf32>
    %15 = vector.shape_cast %14 : vector<1x8x128xf32> to vector<8x128xf32>
    %c0_20 = arith.constant 0 : index
    %c0_21 = arith.constant 0 : index
    %16 = vector.load %arg3[%c0_20, %c0_21] : memref<8x128xf32, #tpu.memory_space<vmem>>, vector<8x128xf32>
    %17 = arith.maximumf %1, %9 : vector<8x128xf32>
    %18 = arith.maximumf %3, %11 : vector<8x128xf32>
    %19 = arith.minimumf %5, %13 : vector<8x128xf32>
    %20 = arith.minimumf %7, %15 : vector<8x128xf32>
    %21 = arith.subf %19, %17 : vector<8x128xf32>
    %cst = arith.constant 1.000000e+00 : f32
    %22 = vector.broadcast %cst : f32 to vector<8x128xf32>
    %23 = arith.addf %21, %22 : vector<8x128xf32>
    %cst_22 = arith.constant 0.000000e+00 : f32
    %24 = vector.broadcast %cst_22 : f32 to vector<8x128xf32>
    %25 = arith.maximumf %23, %24 : vector<8x128xf32>
    %26 = arith.subf %20, %18 : vector<8x128xf32>
    %cst_23 = arith.constant 1.000000e+00 : f32
    %27 = vector.broadcast %cst_23 : f32 to vector<8x128xf32>
    %28 = arith.addf %26, %27 : vector<8x128xf32>
    %cst_24 = arith.constant 0.000000e+00 : f32
    %29 = vector.broadcast %cst_24 : f32 to vector<8x128xf32>
    %30 = arith.maximumf %28, %29 : vector<8x128xf32>
    %31 = arith.mulf %25, %30 : vector<8x128xf32>
    %32 = arith.subf %5, %1 : vector<8x128xf32>
    %cst_25 = arith.constant 1.000000e+00 : f32
    %33 = vector.broadcast %cst_25 : f32 to vector<8x128xf32>
    %34 = arith.addf %32, %33 : vector<8x128xf32>
    %35 = arith.subf %7, %3 : vector<8x128xf32>
    %cst_26 = arith.constant 1.000000e+00 : f32
    %36 = vector.broadcast %cst_26 : f32 to vector<8x128xf32>
    %37 = arith.addf %35, %36 : vector<8x128xf32>
    %38 = arith.mulf %34, %37 : vector<8x128xf32>
    %39 = arith.subf %13, %9 : vector<8x128xf32>
    %cst_27 = arith.constant 1.000000e+00 : f32
    %40 = vector.broadcast %cst_27 : f32 to vector<8x128xf32>
    %41 = arith.addf %39, %40 : vector<8x128xf32>
    %42 = arith.subf %15, %11 : vector<8x128xf32>
    %cst_28 = arith.constant 1.000000e+00 : f32
    %43 = vector.broadcast %cst_28 : f32 to vector<8x128xf32>
    %44 = arith.addf %42, %43 : vector<8x128xf32>
    %45 = arith.mulf %41, %44 : vector<8x128xf32>
    %46 = arith.addf %38, %45 : vector<8x128xf32>
    %47 = arith.subf %46, %31 : vector<8x128xf32>
    %48 = arith.divf %31, %47 : vector<8x128xf32>
    %cst_29 = arith.constant 9.99999997E-7 : f32
    %49 = vector.broadcast %cst_29 : f32 to vector<8x128xf32>
    %50 = arith.maximumf %48, %49 : vector<8x128xf32>
    %51 = math.log %50 : vector<8x128xf32>
    %cst_30 = arith.constant 0.000000e+00 : f32
    %52 = vector.broadcast %cst_30 : f32 to vector<8x128xf32>
    %53 = arith.subf %52, %51 : vector<8x128xf32>
    %54 = arith.mulf %53, %16 : vector<8x128xf32>
    %cst_31 = arith.constant dense<0.000000e+00> : vector<128xf32>
    %55 = vector.multi_reduction <add>, %54, %cst_31 [0] : vector<8x128xf32> to vector<128xf32>
    %56 = vector.shape_cast %55 : vector<128xf32> to vector<1x128xf32>
    %c0_32 = arith.constant 0 : index
    %c0_33 = arith.constant 0 : index
    %c0_34 = arith.constant 0 : index
    %57 = vector.load %arg4[%c0_32, %c0_33, %c0_34] : memref<1x1x128xf32, #tpu.memory_space<vmem>>, vector<1x1x128xf32>
    %58 = vector.shape_cast %57 : vector<1x1x128xf32> to vector<1x128xf32>
    %59 = vector.shape_cast %56 : vector<1x128xf32> to vector<1x1x128xf32>
    tpu.vector_store %arg4[%c0_32, %c0_33, %c0_34], %59 {strides = array<i32>} : memref<1x1x128xf32, #tpu.memory_space<vmem>>, vector<1x1x128xf32>,
    return
  }
  func.func @transform_0(%arg0: i32) -> (i32, i32, i32) {
    %c0_i32 = arith.constant 0 : i32
    %c0_i32_0 = arith.constant 0 : i32
    %c0_i32_1 = arith.constant 0 : i32
    return %c0_i32, %arg0, %c0_i32_0 : i32, i32, i32
  }
  func.func @transform_1(%arg0: i32) -> (i32, i32, i32) {
    %c0_i32 = arith.constant 0 : i32
    %c0_i32_0 = arith.constant 0 : i32
    %c0_i32_1 = arith.constant 0 : i32
    return %c0_i32, %arg0, %c0_i32_0 : i32, i32, i32
  }
  func.func @transform_2(%arg0: i32) -> (i32, i32) {
    %c0_i32 = arith.constant 0 : i32
    %c0_i32_0 = arith.constant 0 : i32
    return %arg0, %c0_i32 : i32, i32
  }
  func.func @transform_3(%arg0: i32) -> (i32, i32, i32) {
    %c0_i32 = arith.constant 0 : i32
    %c0_i32_0 = arith.constant 0 : i32
    %c0_i32_1 = arith.constant 0 : i32
    return %arg0, %c0_i32, %c0_i32_0 : i32, i32, i32
  }
}

</mosaic_0001>

<llo_original>
// kernel: tpu_custom_call.1
$region0: #{tpu_custom_call.1}
  #allocation0 [shape = 'u32[]', space=smem, size = 0x4, offset = 0x4, fixed_abs, tag = 'smem constant byte address 0x4 - core index']
  #allocation1 [shape = 'u32[144,128]{1,0:T(1,128)}', space=vmem, size = 0x12000, scoped, tag = 'internal scratch']
  %s0 = inlined_call_operand.hbm [shape: f32[4,8,128], index: 0, kind: input, shape index: {}]
  %s1 = inlined_call_operand.hbm [shape: f32[4,8,128], index: 1, kind: input, shape index: {}]
  %s2 = inlined_call_operand.hbm [shape: f32[8,128], index: 2, kind: input, shape index: {}]
  %s3 = inlined_call_operand.hbm [shape: f32[1,1,128], index: 3, kind: output, shape index: {}]
  %s4 = sld [smem:[#allocation0]]
  $region34: #{tpu_custom_call.1} parent=0
    _
  %s6 = ssub.s32 1, %s4
  %s7 = scalar_select 0, %s6, %s4
  $region1: #{tpu_custom_call.1} parent=0
    #allocation2 [shape = 'u8[16384]{0}', space=vmem, size = 0x4000, scoped, tag = 'input window, operand 0, single buffered']
    #allocation3 [shape = 's32[1]{0}', space=sflag, size = 0x4, scoped, tag = 'scoped memory for tpu_custom_call.1']
    #allocation4 [shape = 's32[1]{0}', space=sflag, size = 0x4, scoped, tag = 'scoped memory for tpu_custom_call.1']
    #allocation5 [shape = 'u8[16384]{0}', space=vmem, size = 0x4000, scoped, tag = 'input window, operand 1, single buffered']
    #allocation6 [shape = 's32[1]{0}', space=sflag, size = 0x4, scoped, tag = 'scoped memory for tpu_custom_call.1']
    #allocation7 [shape = 'u8[4096]{0}', space=vmem, size = 0x1000, scoped, tag = 'input window, operand 2, single buffered']
    #allocation8 [shape = 'u8[512]{0}', space=vmem, size = 0x400, scoped, tag = 'output window, operand 0, single buffered']
    %8 = vsyncpa [#allocation3], 0
    %9 = vsyncpa [#allocation6], 0
    %10 = vsyncpa [#allocation4], 0
    // Predicated region
    $region2: #{tpu_custom_call.1} parent=1 // pred_check
      _
    $region3: #{tpu_custom_call.1} parent=1 // pred_check_branch
      %12 = sbr.rel (0) target = $region5
    $region4: #{tpu_custom_call.1} parent=1 // pred_region
      %s14 = ssub.s32 512, 512
      %15 = vsyncadd [#allocation3], %s14
      %s16 = sshll.u32 [#allocation2], 4
      %s17 = int_to_ptr.vmem [resolvable:$true] %s16
      %22 = dma.hbm_to_vmem [thread:$0]  %s0, 512, %s17, [#allocation3], 128, 128, 8
    $region5: #{tpu_custom_call.1} parent=1 // pred_fallthru
      _
    // Predicated region
    $region6: #{tpu_custom_call.1} parent=1 // pred_check
      _
    $region7: #{tpu_custom_call.1} parent=1 // pred_check_branch
      %24 = sbr.rel (0) target = $region9
    $region8: #{tpu_custom_call.1} parent=1 // pred_region
      %s26 = ssub.s32 512, 512
      %27 = vsyncadd [#allocation6], %s26
      %s28 = sshll.u32 [#allocation5], 4
      %s29 = int_to_ptr.vmem [resolvable:$true] %s28
      %34 = dma.hbm_to_vmem [thread:$0]  %s1, 512, %s29, [#allocation6], 128, 128, 8
    $region9: #{tpu_custom_call.1} parent=1 // pred_fallthru
      _
    // Predicated region
    $region10: #{tpu_custom_call.1} parent=1 // pred_check
      _
    $region11: #{tpu_custom_call.1} parent=1 // pred_check_branch
      %36 = sbr.rel (0) target = $region13
    $region12: #{tpu_custom_call.1} parent=1 // pred_region
      %s38 = ssub.s32 128, 128
      %39 = vsyncadd [#allocation6], %s38
      %s41 = sshll.u32 [#allocation7], 4
      %s42 = int_to_ptr.vmem [resolvable:$true] %s41
      %44 = dma.hbm_to_vmem [thread:$0]  %s2, 128, %s42, [#allocation6]
    $region13: #{tpu_custom_call.1} parent=1 // pred_fallthru
      _
    // Predicated region
    $region14: #{tpu_custom_call.1} parent=1 // pred_check
      _
    $region15: #{tpu_custom_call.1} parent=1 // pred_check_branch
      %46 = sbr.rel (0) target = $region17
    $region16: #{tpu_custom_call.1} parent=1 // pred_region
      %47 = dma.done [#allocation3], 512
    $region17: #{tpu_custom_call.1} parent=1 // pred_fallthru
      _
    // Predicated region
    $region18: #{tpu_custom_call.1} parent=1 // pred_check
      _
    $region19: #{tpu_custom_call.1} parent=1 // pred_check_branch
      %49 = sbr.rel (0) target = $region21
    $region20: #{tpu_custom_call.1} parent=1 // pred_region
      %50 = dma.done [#allocation6], 512
    $region21: #{tpu_custom_call.1} parent=1 // pred_fallthru
      _
    // Predicated region
    $region22: #{tpu_custom_call.1} parent=1 // pred_check
      _
    $region23: #{tpu_custom_call.1} parent=1 // pred_check_branch
      %52 = sbr.rel (0) target = $region25
    $region24: #{tpu_custom_call.1} parent=1 // pred_region
      %53 = dma.done [#allocation6], 128
    $region25: #{tpu_custom_call.1} parent=1 // pred_fallthru
      _
    %v54 = vld [vmem:[#allocation2] sm:$0xff]
    %s55 = scalar_lea.vmem [#allocation2], 8
    %v56 = vld [vmem:[%s55] sm:$0xff]
    %s57 = scalar_lea.vmem [#allocation2], 16
    %v58 = vld [vmem:[%s57] sm:$0xff]
    %s59 = scalar_lea.vmem [#allocation2], 24
    %v60 = vld [vmem:[%s59] sm:$0xff]
    %v61 = vld [vmem:[#allocation5] sm:$0xff]
    %s62 = scalar_lea.vmem [#allocation5], 8
    %v63 = vld [vmem:[%s62] sm:$0xff]
    %s64 = scalar_lea.vmem [#allocation5], 16
    %v65 = vld [vmem:[%s64] sm:$0xff]
    %s66 = scalar_lea.vmem [#allocation5], 24
    %v67 = vld [vmem:[%s66] sm:$0xff]
    %v68 = vld [vmem:[#allocation7] sm:$0xff]
    %v69 = vmax.f32 %v54, %v61
    %v70 = vmax.f32 %v56, %v63
    %v71 = vmin.f32 %v58, %v65
    %v72 = vmin.f32 %v60, %v67
    %v73 = vsub.f32 %v71, %v69
    %v74 = vadd.f32 %v73, 1.0
    %v75 = vmax.f32 %v74, 0.0
    %v76 = vsub.f32 %v72, %v70
    %v77 = vadd.f32 %v76, 1.0
    %v78 = vmax.f32 %v77, 0.0
    %v79 = vmul.f32 %v75, %v78
    %v80 = vsub.f32 %v58, %v54
    %v81 = vadd.f32 %v80, 1.0
    %v82 = vsub.f32 %v60, %v56
    %v83 = vadd.f32 %v82, 1.0
    %v84 = vmul.f32 %v81, %v83
    %v85 = vsub.f32 %v65, %v61
    %v86 = vadd.f32 %v85, 1.0
    %v87 = vsub.f32 %v67, %v63
    %v88 = vadd.f32 %v87, 1.0
    %v89 = vmul.f32 %v86, %v88
    %v90 = vadd.f32 %v84, %v89
    %v91 = vsub.f32 %v90, %v79
    %v92 = vrcp.pop %v91
    %v93 = vmul.f32 %v79, %v92
    %v94 = vmax.f32 %v93, 1e-06
    %v95 = vlog2.pop %v94
    %v96 = vmul.f32 %v95, 0.6931472
    %v97 = vsub.f32 0.0, %v96
    %v98 = vmul.f32 %v97, %v68
    %v99 = vrot.slane %v98, 4
    %v100 = vadd.f32 %v98, %v99
    %v101 = vrot.slane %v100, 2
    %v102 = vadd.f32 %v100, %v101
    %v103 = vrot.slane %v102, 1
    %v104 = vadd.f32 %v102, %v103
    %105 = vst [vmem:[#allocation8] sm:$0x1] %v104
    // Predicated region
    $region26: #{tpu_custom_call.1} parent=1 // pred_check
      _
    $region27: #{tpu_custom_call.1} parent=1 // pred_check_branch
      %107 = sbr.rel (0) target = $region29
    $region28: #{tpu_custom_call.1} parent=1 // pred_region
      %s109 = ssub.s32 16, 16
      %110 = vsyncadd [#allocation4], %s109
      %s112 = sshll.u32 [#allocation8], 4
      %s113 = int_to_ptr.vmem [resolvable:$true] %s112
      %115 = dma.vmem_to_hbm [thread:$0]  %s113, 16, %s3, [#allocation4]
    $region29: #{tpu_custom_call.1} parent=1 // pred_fallthru
      _
    // Predicated region
    $region30: #{tpu_custom_call.1} parent=1 // pred_check
      _
    $region31: #{tpu_custom_call.1} parent=1 // pred_check_branch
      %117 = sbr.rel (0) target = $region33
    $region32: #{tpu_custom_call.1} parent=1 // pred_region
      %118 = dma.done [#allocation4], 16
    $region33: #{tpu_custom_call.1} parent=1 // pred_fallthru
      _
    %119 = vsyncpa [#allocation3], 1
    %120 = vsyncpa [#allocation6], 1
    %121 = vsyncpa [#allocation4], 1

</llo_original>
